<compile_context>
chip_gen: v7x
topology: tpu7x:2x2x1
jax: 0.10.0
libtpu: 0.0.40
codegen_flags: <defaults>
</compile_context>

<pallas_src>
import math
import functools
from typing import Any, NamedTuple

import jax
import jax.numpy as jnp
from jax import lax
from jax.experimental import pallas as pl
from jax.experimental.pallas import tpu as pltpu

B_J0 = 1.6
_LANE = 128
_SUBLANE = 8


def _round_up(x, m):
    return (x + m - 1) // m * m


# --------------------------------------------------------------------------- #
# Kernel
# --------------------------------------------------------------------------- #
def _spike_cov1d_kernel(w_ref, x_ref, alpha_ref, ro_ref,
                        mem0_ref, spk0_ref, b0_ref,
                        mem_out_ref, spk_out_ref, b_out_ref,
                        *, beta, K, dilation, TN):
    """One lane tile (= whole per-batch segments) per grid step.

    w_ref:     (K, Cout_p, Cin_p)   per-tap weights; bias folded into tap 0's
                                    all-ones input channel (row index Cin).
    x_ref:     (Cin_p, TN + halo)   raw (non-im2col) input slab for this tile; zero
                                    halo keeps shifted tap loads in bounds.
    alpha/ro:  (Cout_p, TN)         exp(-1/tau_*) for ONE tile (grid-invariant block:
                                    every tile covers identical whole segments).
    mem0/b0:   (Cout_p, TN) f32     previous state
    spk0:      (Cout_p, TN) bf16    previous spikes (exact 0/1)
    outputs:   mem (f32), spike (bf16), b (f32) -- aliased to the state inputs.
    """
    # ---- Conv1d as K shifted-slice MXU pushes (in-kernel "im2col") ----
    d_input = jnp.dot(w_ref[0], x_ref[:, pl.ds(0, TN)],
                      preferred_element_type=jnp.float32)
    for k in range(1, K):
        d_input = d_input + jnp.dot(
            w_ref[k], x_ref[:, pl.ds(k * dilation, TN)],
            preferred_element_type=jnp.float32)

    # ---- adaptive LIF update (sn.mem_update_adp, dt=1, R_m=1): pure VPU work ----
    alpha = alpha_ref[...]
    ro = ro_ref[...]
    mem0 = mem0_ref[...]
    spk0 = spk0_ref[...].astype(jnp.float32)          # bf16 0/1 -> f32 (exact)

    b_new = ro * b0_ref[...] + (1.0 - ro) * spk0
    Bth = B_J0 + beta * b_new
    mem_new = mem0 * alpha + (1.0 - alpha) * d_input - Bth * spk0
    spk_new = mem_new - Bth > 0.0                      # heaviside forward

    mem_out_ref[...] = mem_new
    b_out_ref[...] = b_new
    spk_out_ref[...] = spk_new.astype(spk_out_ref.dtype)


# --------------------------------------------------------------------------- #
# Plan: static layout + prepared (padded) parameters, built once per sequence.
# --------------------------------------------------------------------------- #
class _Plan(NamedTuple):
    Bsz: int
    Cin: int
    Cin_p: int
    L: int
    Cout: int
    Cout_p: int
    K: int
    dilation: int
    pad: int
    Lout: int
    S: int                 # per-batch lane segment (128-aligned, >= Lout + (K-1)*dil)
    segs_per_tile: int
    TN: int                # lane tile = segs_per_tile * S
    TNx: int               # x lane tile incl. zero halo
    grid: int
    N_p: int               # Bsz * S = grid * TN (fused state lane width)
    beta: float
    mxu_dtype: Any
    spike_dtype: Any
    vmem_limit: int
    w: Any                 # (K, Cout_p, Cin_p), bias folded into tap 0 / ones channel
    alpha: Any             # (Cout_p, TN) f32  (one tile, grid-invariant)
    ro: Any                # (Cout_p, TN) f32


def spike_cov1d_prepare(weight, bias, tau_m, tau_adp, batch_size, length,
                        *, kernel_size=5, stride=1, dilation=1, is_adaptive=1,
                        use_bf16_mxu=True, target_tile_lanes=8192,
                        vmem_budget_bytes=12 * 1024 * 1024):
    """Builds the kernel layout plan and the padded parameter arrays (done once)."""
    assert stride == 1, "stride=1 only"
    # TODO(synk): strides>1 and MaxPool1d/AvgPool1d pooling paths not implemented.
    Bsz, L = int(batch_size), int(length)
    Cout, Cin, K = weight.shape
    assert K == kernel_size
    pad = int(math.ceil((K - 1) * dilation / 2))
    Lout = L + 2 * pad - dilation * (K - 1)
    assert tau_m.shape == (Cout, Lout) and tau_adp.shape == (Cout, Lout)

    f32 = jnp.float32
    mxu_dt = jnp.bfloat16 if use_bf16_mxu else f32   # bf16 MXU operands fine on v5e/v6e/v7x
    spike_dt = jnp.bfloat16                          # spikes are exactly 0/1 -> lossless

    # Per-batch segment: holds the conv-padded input (Lout + (K-1)*dil) and keeps
    # segment/tile boundaries 128-lane aligned so tap shifts never cross batches.
    S = _round_up(Lout + dilation * (K - 1), _LANE)
    N_p = Bsz * S
    Cin_p = _round_up(Cin + 1, _SUBLANE)             # +1 = all-ones bias channel
    Cout_p = _round_up(Cout, _SUBLANE)

    # ---- lane-tile selection: whole segments per tile, as big as the VMEM budget /
    # ~8K-lane target allows (per-step overhead dominates small tiles), with an even
    # number of tiles preferred so v7x's two TensorCores split the 'parallel' axis. ----
    xbytes = jnp.dtype(mxu_dt).itemsize
    stream_lane_bytes = Cin_p * xbytes + 2 * Cout_p * (4 + 2 + 4)   # x + state in/out
    resident_lane_bytes = 2 * Cout_p * 4                            # alpha, ro
    lane_bytes = 2 * (stream_lane_bytes + resident_lane_bytes)      # double-buffered (cons.)

    divisors = [m for m in range(1, Bsz + 1) if Bsz % m == 0]
    feasible = [m for m in divisors if S * m * lane_bytes <= vmem_budget_bytes] or [1]
    under = [m for m in feasible if S * m <= target_tile_lanes] or [feasible[0]]
    even = [m for m in under if (Bsz // m) % 2 == 0]
    segs_per_tile = max(even) if even else max(under)
    TN = S * segs_per_tile
    grid = Bsz // segs_per_tile
    halo = _round_up(dilation * (K - 1), _LANE) if dilation * (K - 1) > 0 else 0
    TNx = TN + halo

    # Comfortably above the working set; within every generation's physical VMEM
    # (raises v5e's 16 MiB scoped default, <= v7x's 64 MiB physical).
    vmem_limit = 32 * 1024 * 1024

    # ---- weights: (Cout, Cin, K) -> (K, Cout_p, Cin_p); bias folded into tap 0 via the
    # all-ones input channel at row index Cin (lives in the Cin padding rows). ----
    w3 = jnp.zeros((K, Cout_p, Cin_p), f32)
    w3 = w3.at[:, :Cout, :Cin].set(jnp.transpose(weight.astype(f32), (2, 0, 1)))
    w3 = w3.at[0, :Cout, Cin].set(bias.astype(f32))
    w3 = w3.astype(mxu_dt)

    # ---- alpha / ro: exp() once, ONE tile wide (every tile sees the same per-segment
    # pattern), kept VMEM-resident through a grid-invariant BlockSpec. ----
    alpha = jnp.exp(-1.0 / tau_m.astype(f32))        # (Cout, Lout)
    ro = jnp.exp(-1.0 / tau_adp.astype(f32))

    def seg_tile(a):                                  # (Cout, Lout) -> (Cout_p, TN)
        a = jnp.pad(a, ((0, Cout_p - Cout), (0, S - Lout)))
        return jnp.tile(a, (1, segs_per_tile))

    beta = 1.8 if is_adaptive else 0.0
    return _Plan(Bsz=Bsz, Cin=Cin, Cin_p=Cin_p, L=L, Cout=Cout, Cout_p=Cout_p, K=K,
                 dilation=dilation, pad=pad, Lout=Lout, S=S,
                 segs_per_tile=segs_per_tile, TN=TN, TNx=TNx, grid=grid, N_p=N_p,
                 beta=beta, mxu_dtype=mxu_dt, spike_dtype=spike_dt,
                 vmem_limit=vmem_limit, w=w3, alpha=seg_tile(alpha), ro=seg_tile(ro))


# --------------------------------------------------------------------------- #
# Layout helpers (fused kernel layout <-> user (Bsz, Cout, Lout) layout)
# --------------------------------------------------------------------------- #
def fuse_state(plan, mem, spike, b):
    """(Bsz, Cout, Lout) user state -> fused (Cout_p, Bsz*S) kernel layout."""
    def f(a, dtype):
        a = a.astype(jnp.float32)
        a = jnp.pad(a, ((0, 0), (0, plan.Cout_p - plan.Cout), (0, plan.S - plan.Lout)))
        return a.transpose(1, 0, 2).reshape(plan.Cout_p, plan.N_p).astype(dtype)
    return f(mem, jnp.float32), f(spike, plan.spike_dtype), f(b, jnp.float32)


def unfuse_state(plan, fused):
    """Fused (Cout_p, Bsz*S) -> (Bsz, Cout, Lout) f32."""
    a = fused.reshape(plan.Cout_p, plan.Bsz, plan.S).transpose(1, 0, 2)
    return a[:, :plan.Cout, :plan.Lout].astype(jnp.float32)


def init_state_fused(plan):
    """set_neuron_state(batch_size): mem=0, spike=0, b=B_J0, already in fused layout."""
    mem = jnp.zeros((plan.Cout_p, plan.N_p), jnp.float32)
    spk = jnp.zeros((plan.Cout_p, plan.N_p), plan.spike_dtype)
    b = jnp.full((plan.Cout_p, plan.N_p), B_J0, jnp.float32)
    return mem, spk, b


def layout_input(plan, x):
    """(Bsz, Cin, L) -> (Cin_p, grid*TNx) kernel x layout.

    Per-batch segment = [conv pad zeros | x | zeros to S]; all-ones bias channel at
    row Cin; a zero lane halo per tile keeps shifted tap loads in bounds.
    """
    xp = jnp.pad(x.astype(jnp.float32),
                 ((0, 0), (0, 0), (plan.pad, plan.S - plan.L - plan.pad)))   # (B, Cin, S)
    ones = jnp.ones((plan.Bsz, 1, plan.S), xp.dtype)
    zeros = jnp.zeros((plan.Bsz, plan.Cin_p - plan.Cin - 1, plan.S), xp.dtype)
    xp = jnp.concatenate([xp, ones, zeros], axis=1)                          # (B, Cin_p, S)
    xt = xp.reshape(plan.grid, plan.segs_per_tile, plan.Cin_p, plan.S)
    xt = xt.transpose(0, 2, 1, 3).reshape(plan.grid, plan.Cin_p, plan.TN)
    xt = jnp.pad(xt, ((0, 0), (0, 0), (0, plan.TNx - plan.TN)))              # zero halo
    return xt.transpose(1, 0, 2).reshape(plan.Cin_p, plan.grid * plan.TNx).astype(plan.mxu_dtype)


# --------------------------------------------------------------------------- #
# One timestep on fused state (the pallas_call)
# --------------------------------------------------------------------------- #
def spike_cov1d_step_fused(plan, x_lanes, mem_f, spk_f, b_f):
    kernel = functools.partial(_spike_cov1d_kernel, beta=plan.beta, K=plan.K,
                               dilation=plan.dilation, TN=plan.TN)

    state_spec = pl.BlockSpec((plan.Cout_p, plan.TN), lambda i: (0, i))
    # Grid-invariant blocks: fetched once, VMEM-resident (no re-DMA on revisit).
    inv_spec = pl.BlockSpec((plan.Cout_p, plan.TN), lambda i: (0, 0))

    grid_spec = pltpu.PrefetchScalarGridSpec(
        num_scalar_prefetch=0,
        grid=(plan.grid,),
        in_specs=[
            pl.BlockSpec((plan.K, plan.Cout_p, plan.Cin_p), lambda i: (0, 0, 0)),  # weights
            pl.BlockSpec((plan.Cin_p, plan.TNx), lambda i: (0, i)),                # raw x (+halo)
            inv_spec,      # alpha
            inv_spec,      # ro
            state_spec,    # mem   (f32)
            state_spec,    # spike (bf16)
            state_spec,    # b     (f32)
        ],
        out_specs=[state_spec, state_spec, state_spec],
    )

    return pl.pallas_call(
        kernel,
        out_shape=(jax.ShapeDtypeStruct((plan.Cout_p, plan.N_p), jnp.float32),
                   jax.ShapeDtypeStruct((plan.Cout_p, plan.N_p), plan.spike_dtype),
                   jax.ShapeDtypeStruct((plan.Cout_p, plan.N_p), jnp.float32)),
        grid_spec=grid_spec,
        # in-place state update: mem -> mem_out, spike -> spk_out, b -> b_out
        input_output_aliases={4: 0, 5: 1, 6: 2},
        compiler_params=pltpu.CompilerParams(
            dimension_semantics=("parallel",),
            vmem_limit_bytes=plan.vmem_limit),
    )(plan.w, x_lanes, plan.alpha, plan.ro, mem_f, spk_f, b_f)


# --------------------------------------------------------------------------- #
# User-facing wrappers
# --------------------------------------------------------------------------- #
def spike_cov1d_forward(x, weight, bias, tau_m, tau_adp, mem, spike, b,
                        *, kernel_size=5, stride=1, dilation=1, is_adaptive=1,
                        use_bf16_mxu=True):
    """Single-timestep API. Returns (mem, spike, b), each (Bsz, Cout, Lout) f32.

    For recurrent sequences prefer spike_cov1d_sequence(), which keeps the state in the
    fused kernel layout across timesteps (one layout conversion per sequence).
    """
    Bsz, Cin, L = x.shape
    plan = spike_cov1d_prepare(weight, bias, tau_m, tau_adp, Bsz, L,
                               kernel_size=kernel_size, stride=stride, dilation=dilation,
                               is_adaptive=is_adaptive, use_bf16_mxu=use_bf16_mxu)
    mem_f, spk_f, b_f = fuse_state(plan, mem, spike, b)
    x_l = layout_input(plan, x)
    mem_f, spk_f, b_f = spike_cov1d_step_fused(plan, x_l, mem_f, spk_f, b_f)
    return (unfuse_state(plan, mem_f), unfuse_state(plan, spk_f), unfuse_state(plan, b_f))


def spike_cov1d_sequence(xs, weight, bias, tau_m, tau_adp,
                         *, kernel_size=5, stride=1, dilation=1, is_adaptive=1,
                         use_bf16_mxu=True):
    """Run T timesteps from set_neuron_state() initial state.  xs: (T, Bsz, Cin, L).

    The state (mem, spike, b) is carried in the fused kernel layout through lax.scan;
    parameter prep and layout conversion happen once per sequence, not per step.
    Returns (mem_seq, spike_seq) of shape (T, Bsz, Cout, Lout) and the final
    (mem, spike, b) state in user layout.
    """
    T, Bsz, Cin, L = xs.shape
    plan = spike_cov1d_prepare(weight, bias, tau_m, tau_adp, Bsz, L,
                               kernel_size=kernel_size, stride=stride, dilation=dilation,
                               is_adaptive=is_adaptive, use_bf16_mxu=use_bf16_mxu)

    def step(carry, x_t):
        mem_f, spk_f, b_f = carry
        x_l = layout_input(plan, x_t)
        mem_f, spk_f, b_f = spike_cov1d_step_fused(plan, x_l, mem_f, spk_f, b_f)
        return (mem_f, spk_f, b_f), (mem_f, spk_f)

    carry, (mem_seq_f, spk_seq_f) = lax.scan(step, init_state_fused(plan), xs)

    # one layout conversion for the whole sequence
    mem_seq = jax.vmap(lambda a: unfuse_state(plan, a))(mem_seq_f)
    spk_seq = jax.vmap(lambda a: unfuse_state(plan, a))(spk_seq_f)
    final = tuple(unfuse_state(plan, s) for s in carry)
    return mem_seq, spk_seq, final


# --------------------------------------------------------------------------- #
# Pure-JAX reference
# --------------------------------------------------------------------------- #
def _reference_forward(x, weight, bias, tau_m, tau_adp, mem, spike, b,
                       *, kernel_size=5, dilation=1, is_adaptive=1):
    pad = int(math.ceil((kernel_size - 1) * dilation / 2))
    d_input = lax.conv_general_dilated(
        x.astype(jnp.float32), weight.astype(jnp.float32),
        window_strides=(1,), padding=[(pad, pad)], rhs_dilation=(dilation,),
        dimension_numbers=('NCH', 'OIH', 'NCH')) + bias.reshape(1, -1, 1)
    alpha = jnp.exp(-1.0 / tau_m)
    ro = jnp.exp(-1.0 / tau_adp)
    beta = 1.8 if is_adaptive else 0.0
    b_new = ro * b + (1.0 - ro) * spike
    Bth = B_J0 + beta * b_new
    mem_new = mem * alpha + (1.0 - alpha) * d_input - Bth * spike
    spk_new = (mem_new - Bth > 0.0).astype(jnp.float32)
    return mem_new, spk_new, b_new


if __name__ == "__main__":
    # SpikeCov1D(input_size=(4, 16), output_dim=8, kernel_size=5)
    Bsz, Cin, L = 2, 4, 16
    Cout, K = 8, 5
    dilation = 1
    T = 4

    key = jax.random.PRNGKey(0)
    k_x, k_w, k_bias, k_tm, k_ta, k_xs, k_m0, k_s0, k_b0 = jax.random.split(key, 9)

    x = (jax.random.uniform(k_x, (Bsz, Cin, L)) > 0.5).astype(jnp.float32)  # binary spikes
    fan_in = Cin * K
    weight = jax.random.normal(k_w, (Cout, Cin, K), jnp.float32) / jnp.sqrt(fan_in)
    bias = 0.1 * jax.random.normal(k_bias, (Cout,), jnp.float32)

    pad = int(math.ceil((K - 1) * dilation / 2))
    Lout = L + 2 * pad - dilation * (K - 1)                       # = 16
    tau_m = 20.0 + 5.0 * jax.random.normal(k_tm, (Cout, Lout), jnp.float32)
    tau_adp = 100.0 + 5.0 * jax.random.normal(k_ta, (Cout, Lout), jnp.float32)

    # ---- single step with a non-trivial state (exercises all LIF terms) ----
    mem0 = 8.0 * jax.random.normal(k_m0, (Bsz, Cout, Lout), jnp.float32)
    spk0 = (jax.random.uniform(k_s0, (Bsz, Cout, Lout)) > 0.5).astype(jnp.float32)
    b0 = 1.0 + jax.random.uniform(k_b0, (Bsz, Cout, Lout), jnp.float32)

    mem_ref, spk_ref, b_ref = _reference_forward(
        x, weight, bias, tau_m, tau_adp, mem0, spk0, b0,
        kernel_size=K, dilation=dilation, is_adaptive=1)

    # f32 MXU path: tight check
    mem, spike, bn = spike_cov1d_forward(x, weight, bias, tau_m, tau_adp, mem0, spk0, b0,
                                         kernel_size=K, dilation=dilation, is_adaptive=1,
                                         use_bf16_mxu=False)
    jax.block_until_ready((mem, spike, bn))
    assert jnp.allclose(mem, mem_ref, atol=2e-4, rtol=1e-4), "mem mismatch (f32 path)"
    assert jnp.array_equal(spike, spk_ref), "spike mismatch (f32 path)"
    assert jnp.allclose(bn, b_ref, atol=1e-5, rtol=1e-5), "b mismatch (f32 path)"

    # bf16 MXU path (fast path on v5e/v6e/v7x): loose check (weight/bias quantization ~1e-3)
    mem_bf, spike_bf, _ = spike_cov1d_forward(x, weight, bias, tau_m, tau_adp, mem0, spk0, b0,
                                              kernel_size=K, dilation=dilation, is_adaptive=1,
                                              use_bf16_mxu=True)
    jax.block_until_ready((mem_bf, spike_bf))
    assert jnp.allclose(mem_bf, mem_ref, atol=1e-2, rtol=1e-2), "mem mismatch (bf16 path)"

    # ---- T-step sequence: fused-state carry (verifies mem/spike/b persistence) ----
    xs = (jax.random.uniform(k_xs, (T, Bsz, Cin, L)) > 0.5).astype(jnp.float32)
    mem_seq, spk_seq, (mem_T, spk_T, b_T) = spike_cov1d_sequence(
        xs, weight, bias, tau_m, tau_adp,
        kernel_size=K, dilation=dilation, is_adaptive=1, use_bf16_mxu=False)
    jax.block_until_ready((mem_seq, spk_seq, mem_T, spk_T, b_T))

    m_r = jnp.zeros((Bsz, Cout, Lout), jnp.float32)          # set_neuron_state(batch_size)
    s_r = jnp.zeros((Bsz, Cout, Lout), jnp.float32)
    b_r = jnp.ones((Bsz, Cout, Lout), jnp.float32) * B_J0
    for t in range(T):
        m_r, s_r, b_r = _reference_forward(xs[t], weight, bias, tau_m, tau_adp, m_r, s_r, b_r,
                                           kernel_size=K, dilation=dilation, is_adaptive=1)
        assert jnp.allclose(mem_seq[t], m_r, atol=1e-3, rtol=1e-3), f"seq mem mismatch @t={t}"
        assert jnp.array_equal(spk_seq[t], s_r), f"seq spike mismatch @t={t}"
    assert jnp.allclose(mem_T, m_r, atol=1e-3, rtol=1e-3), "final mem mismatch"
    assert jnp.allclose(b_T, b_r, atol=1e-5, rtol=1e-5), "final b mismatch (persistence)"

    print("KERNEL_OK")
</pallas_src>

<mosaic_0001>
module attributes {stable_mosaic.version = 11 : i64} {
  func.func @_spike_cov1d_kernel(%arg0: i32, %arg1: memref<5x8x8xf32, #tpu.memory_space<vmem>>, %arg2: memref<8x256xf32, #tpu.memory_space<vmem>>, %arg3: memref<8x128xf32, #tpu.memory_space<vmem>>, %arg4: memref<8x128xf32, #tpu.memory_space<vmem>>, %arg5: memref<8x128xf32, #tpu.memory_space<vmem>>, %arg6: memref<8x128xbf16, #tpu.memory_space<vmem>>, %arg7: memref<8x128xf32, #tpu.memory_space<vmem>>, %arg8: memref<8x128xf32, #tpu.memory_space<vmem>>, %arg9: memref<8x128xbf16, #tpu.memory_space<vmem>>, %arg10: memref<8x128xf32, #tpu.memory_space<vmem>>) attributes {dimension_semantics = [#tpu.dimension_semantics<parallel>], iteration_bounds = array<i64: 2>, scalar_prefetch = 0 : i64, scratch_operands = 0 : i64, tpu.core_type = #tpu.core_type<tc>, window_params = [{pipeline_mode = #tpu.pipeline_mode<synchronous>, transform_indices = @transform_0, window_bounds = array<i64: 5, 8, 8>}, {transform_indices = @transform_1, window_bounds = array<i64: 8, 256>}, {pipeline_mode = #tpu.pipeline_mode<synchronous>, transform_indices = @transform_2, window_bounds = array<i64: 8, 128>}, {pipeline_mode = #tpu.pipeline_mode<synchronous>, transform_indices = @transform_3, window_bounds = array<i64: 8, 128>}, {transform_indices = @transform_4, window_bounds = array<i64: 8, 128>}, {transform_indices = @transform_5, window_bounds = array<i64: 8, 128>}, {transform_indices = @transform_6, window_bounds = array<i64: 8, 128>}, {transform_indices = @transform_7, window_bounds = array<i64: 8, 128>}, {transform_indices = @transform_8, window_bounds = array<i64: 8, 128>}, {transform_indices = @transform_9, window_bounds = array<i64: 8, 128>}]} {
    %c0 = arith.constant 0 : index
    %c0_0 = arith.constant 0 : index
    %c0_1 = arith.constant 0 : index
    %0 = vector.load %arg1[%c0, %c0_0, %c0_1] : memref<5x8x8xf32, #tpu.memory_space<vmem>>, vector<1x8x8xf32>
    %1 = vector.shape_cast %0 : vector<1x8x8xf32> to vector<8x8xf32>
    %c0_2 = arith.constant 0 : index
    %c0_3 = arith.constant 0 : index
    %2 = vector.load %arg2[%c0_2, %c0_3] : memref<8x256xf32, #tpu.memory_space<vmem>>, vector<8x128xf32>
    %cst = arith.constant dense<0.000000e+00> : vector<8x128xf32>
    %3 = tpu.matmul %1, %2, %cst {dimension_numbers = #tpu.dot_dimension_numbers<[1], [0], [0], [1], [0, 0, 1, 1], [], []>} : vector<8x8xf32>, vector<8x128xf32>, vector<8x128xf32> -> vector<8x128xf32>
    %c1 = arith.constant 1 : index
    %c0_4 = arith.constant 0 : index
    %c0_5 = arith.constant 0 : index
    %4 = vector.load %arg1[%c1, %c0_4, %c0_5] : memref<5x8x8xf32, #tpu.memory_space<vmem>>, vector<1x8x8xf32>
    %5 = vector.shape_cast %4 : vector<1x8x8xf32> to vector<8x8xf32>
    %c0_6 = arith.constant 0 : index
    %c1_7 = arith.constant 1 : index
    %6 = vector.load %arg2[%c0_6, %c1_7] : memref<8x256xf32, #tpu.memory_space<vmem>>, vector<8x128xf32>
    %cst_8 = arith.constant dense<0.000000e+00> : vector<8x128xf32>
    %7 = tpu.matmul %5, %6, %cst_8 {dimension_numbers = #tpu.dot_dimension_numbers<[1], [0], [0], [1], [0, 0, 1, 1], [], []>} : vector<8x8xf32>, vector<8x128xf32>, vector<8x128xf32> -> vector<8x128xf32>
    %8 = arith.addf %3, %7 : vector<8x128xf32>
    %c2 = arith.constant 2 : index
    %c0_9 = arith.constant 0 : index
    %c0_10 = arith.constant 0 : index
    %9 = vector.load %arg1[%c2, %c0_9, %c0_10] : memref<5x8x8xf32, #tpu.memory_space<vmem>>, vector<1x8x8xf32>
    %10 = vector.shape_cast %9 : vector<1x8x8xf32> to vector<8x8xf32>
    %c0_11 = arith.constant 0 : index
    %c2_12 = arith.constant 2 : index
    %11 = vector.load %arg2[%c0_11, %c2_12] : memref<8x256xf32, #tpu.memory_space<vmem>>, vector<8x128xf32>
    %cst_13 = arith.constant dense<0.000000e+00> : vector<8x128xf32>
    %12 = tpu.matmul %10, %11, %cst_13 {dimension_numbers = #tpu.dot_dimension_numbers<[1], [0], [0], [1], [0, 0, 1, 1], [], []>} : vector<8x8xf32>, vector<8x128xf32>, vector<8x128xf32> -> vector<8x128xf32>
    %13 = arith.addf %8, %12 : vector<8x128xf32>
    %c3 = arith.constant 3 : index
    %c0_14 = arith.constant 0 : index
    %c0_15 = arith.constant 0 : index
    %14 = vector.load %arg1[%c3, %c0_14, %c0_15] : memref<5x8x8xf32, #tpu.memory_space<vmem>>, vector<1x8x8xf32>
    %15 = vector.shape_cast %14 : vector<1x8x8xf32> to vector<8x8xf32>
    %c0_16 = arith.constant 0 : index
    %c3_17 = arith.constant 3 : index
    %16 = vector.load %arg2[%c0_16, %c3_17] : memref<8x256xf32, #tpu.memory_space<vmem>>, vector<8x128xf32>
    %cst_18 = arith.constant dense<0.000000e+00> : vector<8x128xf32>
    %17 = tpu.matmul %15, %16, %cst_18 {dimension_numbers = #tpu.dot_dimension_numbers<[1], [0], [0], [1], [0, 0, 1, 1], [], []>} : vector<8x8xf32>, vector<8x128xf32>, vector<8x128xf32> -> vector<8x128xf32>
    %18 = arith.addf %13, %17 : vector<8x128xf32>
    %c4 = arith.constant 4 : index
    %c0_19 = arith.constant 0 : index
    %c0_20 = arith.constant 0 : index
    %19 = vector.load %arg1[%c4, %c0_19, %c0_20] : memref<5x8x8xf32, #tpu.memory_space<vmem>>, vector<1x8x8xf32>
    %20 = vector.shape_cast %19 : vector<1x8x8xf32> to vector<8x8xf32>
    %c0_21 = arith.constant 0 : index
    %c4_22 = arith.constant 4 : index
    %21 = vector.load %arg2[%c0_21, %c4_22] : memref<8x256xf32, #tpu.memory_space<vmem>>, vector<8x128xf32>
    %cst_23 = arith.constant dense<0.000000e+00> : vector<8x128xf32>
    %22 = tpu.matmul %20, %21, %cst_23 {dimension_numbers = #tpu.dot_dimension_numbers<[1], [0], [0], [1], [0, 0, 1, 1], [], []>} : vector<8x8xf32>, vector<8x128xf32>, vector<8x128xf32> -> vector<8x128xf32>
    %23 = arith.addf %18, %22 : vector<8x128xf32>
    %c0_24 = arith.constant 0 : index
    %c0_25 = arith.constant 0 : index
    %24 = vector.load %arg3[%c0_24, %c0_25] : memref<8x128xf32, #tpu.memory_space<vmem>>, vector<8x128xf32>
    %c0_26 = arith.constant 0 : index
    %c0_27 = arith.constant 0 : index
    %25 = vector.load %arg4[%c0_26, %c0_27] : memref<8x128xf32, #tpu.memory_space<vmem>>, vector<8x128xf32>
    %c0_28 = arith.constant 0 : index
    %c0_29 = arith.constant 0 : index
    %26 = vector.load %arg5[%c0_28, %c0_29] : memref<8x128xf32, #tpu.memory_space<vmem>>, vector<8x128xf32>
    %c0_30 = arith.constant 0 : index
    %c0_31 = arith.constant 0 : index
    %27 = vector.load %arg6[%c0_30, %c0_31] : memref<8x128xbf16, #tpu.memory_space<vmem>>, vector<8x128xbf16>
    %28 = arith.extf %27 : vector<8x128xbf16> to vector<8x128xf32>
    %c0_32 = arith.constant 0 : index
    %c0_33 = arith.constant 0 : index
    %29 = vector.load %arg7[%c0_32, %c0_33] : memref<8x128xf32, #tpu.memory_space<vmem>>, vector<8x128xf32>
    %30 = arith.mulf %25, %29 : vector<8x128xf32>
    %cst_34 = arith.constant 1.000000e+00 : f32
    %31 = vector.broadcast %cst_34 : f32 to vector<8x128xf32>
    %32 = arith.subf %31, %25 : vector<8x128xf32>
    %33 = arith.mulf %32, %28 : vector<8x128xf32>
    %34 = arith.addf %30, %33 : vector<8x128xf32>
    %cst_35 = arith.constant 1.800000e+00 : f32
    %35 = vector.broadcast %cst_35 : f32 to vector<8x128xf32>
    %36 = arith.mulf %35, %34 : vector<8x128xf32>
    %cst_36 = arith.constant 1.600000e+00 : f32
    %37 = vector.broadcast %cst_36 : f32 to vector<8x128xf32>
    %38 = arith.addf %37, %36 : vector<8x128xf32>
    %39 = arith.mulf %26, %24 : vector<8x128xf32>
    %cst_37 = arith.constant 1.000000e+00 : f32
    %40 = vector.broadcast %cst_37 : f32 to vector<8x128xf32>
    %41 = arith.subf %40, %24 : vector<8x128xf32>
    %42 = arith.mulf %41, %23 : vector<8x128xf32>
    %43 = arith.addf %39, %42 : vector<8x128xf32>
    %44 = arith.mulf %38, %28 : vector<8x128xf32>
    %45 = arith.subf %43, %44 : vector<8x128xf32>
    %46 = arith.subf %45, %38 : vector<8x128xf32>
    %cst_38 = arith.constant 0.000000e+00 : f32
    %47 = vector.broadcast %cst_38 : f32 to vector<8x128xf32>
    %48 = arith.cmpf ogt, %46, %47 : vector<8x128xf32>
    %c0_39 = arith.constant 0 : index
    %c0_40 = arith.constant 0 : index
    %49 = vector.load %arg8[%c0_39, %c0_40] : memref<8x128xf32, #tpu.memory_space<vmem>>, vector<8x128xf32>
    tpu.vector_store %arg8[%c0_39, %c0_40], %45 {strides = array<i32>} : memref<8x128xf32, #tpu.memory_space<vmem>>, vector<8x128xf32>,
    %c0_41 = arith.constant 0 : index
    %c0_42 = arith.constant 0 : index
    %50 = vector.load %arg10[%c0_41, %c0_42] : memref<8x128xf32, #tpu.memory_space<vmem>>, vector<8x128xf32>
    tpu.vector_store %arg10[%c0_41, %c0_42], %34 {strides = array<i32>} : memref<8x128xf32, #tpu.memory_space<vmem>>, vector<8x128xf32>,
    %51 = arith.extui %48 : vector<8x128xi1> to vector<8x128xi32>
    %52 = arith.sitofp %51 : vector<8x128xi32> to vector<8x128xf32>
    %53 = arith.truncf %52 : vector<8x128xf32> to vector<8x128xbf16>
    %c0_43 = arith.constant 0 : index
    %c0_44 = arith.constant 0 : index
    %54 = vector.load %arg9[%c0_43, %c0_44] : memref<8x128xbf16, #tpu.memory_space<vmem>>, vector<8x128xbf16>
    tpu.vector_store %arg9[%c0_43, %c0_44], %53 {strides = array<i32>} : memref<8x128xbf16, #tpu.memory_space<vmem>>, vector<8x128xbf16>,
    return
  }
  func.func @transform_0(%arg0: i32) -> (i32, i32, i32) {
    %c0_i32 = arith.constant 0 : i32
    %c0_i32_0 = arith.constant 0 : i32
    %c0_i32_1 = arith.constant 0 : i32
    %c0_i32_2 = arith.constant 0 : i32
    return %c0_i32, %c0_i32_0, %c0_i32_1 : i32, i32, i32
  }
  func.func @transform_1(%arg0: i32) -> (i32, i32) {
    %c0_i32 = arith.constant 0 : i32
    %c0_i32_0 = arith.constant 0 : i32
    return %c0_i32, %arg0 : i32, i32
  }
  func.func @transform_2(%arg0: i32) -> (i32, i32) {
    %c0_i32 = arith.constant 0 : i32
    %c0_i32_0 = arith.constant 0 : i32
    %c0_i32_1 = arith.constant 0 : i32
    return %c0_i32, %c0_i32_0 : i32, i32
  }
  func.func @transform_3(%arg0: i32) -> (i32, i32) {
    %c0_i32 = arith.constant 0 : i32
    %c0_i32_0 = arith.constant 0 : i32
    %c0_i32_1 = arith.constant 0 : i32
    return %c0_i32, %c0_i32_0 : i32, i32
  }
  func.func @transform_4(%arg0: i32) -> (i32, i32) {
    %c0_i32 = arith.constant 0 : i32
    %c0_i32_0 = arith.constant 0 : i32
    return %c0_i32, %arg0 : i32, i32
  }
  func.func @transform_5(%arg0: i32) -> (i32, i32) {
    %c0_i32 = arith.constant 0 : i32
    %c0_i32_0 = arith.constant 0 : i32
    return %c0_i32, %arg0 : i32, i32
  }
  func.func @transform_6(%arg0: i32) -> (i32, i32) {
    %c0_i32 = arith.constant 0 : i32
    %c0_i32_0 = arith.constant 0 : i32
    return %c0_i32, %arg0 : i32, i32
  }
  func.func @transform_7(%arg0: i32) -> (i32, i32) {
    %c0_i32 = arith.constant 0 : i32
    %c0_i32_0 = arith.constant 0 : i32
    return %c0_i32, %arg0 : i32, i32
  }
  func.func @transform_8(%arg0: i32) -> (i32, i32) {
    %c0_i32 = arith.constant 0 : i32
    %c0_i32_0 = arith.constant 0 : i32
    return %c0_i32, %arg0 : i32, i32
  }
  func.func @transform_9(%arg0: i32) -> (i32, i32) {
    %c0_i32 = arith.constant 0 : i32
    %c0_i32_0 = arith.constant 0 : i32
    return %c0_i32, %arg0 : i32, i32
  }
}

</mosaic_0001>

<llo_original>
// kernel: tpu_custom_call.1
$region0: #{tpu_custom_call.1}
  #allocation0 [shape = 'u32[]', space=smem, size = 0x4, offset = 0x4, fixed_abs, tag = 'smem constant byte address 0x4 - core index']
  #allocation1 [shape = 'u32[144,128]{1,0:T(1,128)}', space=vmem, size = 0x12000, scoped, tag = 'internal scratch']
  %s0 = inlined_call_operand.vmem [shape: f32[5,8,8], index: 0, kind: input, shape index: {}]
  %s1 = inlined_call_operand.vmem [shape: f32[8,512], index: 1, kind: input, shape index: {}]
  %s2 = inlined_call_operand.vmem [shape: f32[8,128], index: 2, kind: input, shape index: {}]
  %s3 = inlined_call_operand.vmem [shape: f32[8,128], index: 3, kind: input, shape index: {}]
  %s4 = inlined_call_operand.hbm [shape: f32[8,256], index: 4, kind: input, shape index: {}, may-alias: {4,7}]
  %s5 = inlined_call_operand.hbm [shape: bf16[8,256], index: 5, kind: input, shape index: {}, may-alias: {5,8}]
  %s6 = inlined_call_operand.hbm [shape: f32[8,256], index: 6, kind: input, shape index: {}, may-alias: {6,9}]
  %s7 = inlined_call_operand.hbm [shape: f32[8,256], index: 7, kind: output, shape index: {0}, may-alias: {4,7}]
  %s8 = inlined_call_operand.hbm [shape: bf16[8,256], index: 8, kind: output, shape index: {1}, may-alias: {5,8}]
  %s9 = inlined_call_operand.hbm [shape: f32[8,256], index: 9, kind: output, shape index: {2}, may-alias: {6,9}]
  %10 = xla_tuple %s7, %s8, %s9
  %s11 = sld [smem:[#allocation0]]
  $region89: #{tpu_custom_call.1} parent=0
    _
  %s13 = ssub.s32 1, %s11
  %s14 = scalar_select 0, %s13, %s11
  $region1: #{tpu_custom_call.1} parent=0
    #allocation2 [shape = 'u8[8192]{0}', space=vmem, size = 0x2000, scoped, tag = 'input window, operand 4']
    #allocation3 [shape = 's32[2]{0}', space=sflag, size = 0x8, scoped, tag = 'scoped memory for tpu_custom_call.1']
    #allocation4 [shape = 's32[2]{0}', space=sflag, size = 0x8, scoped, tag = 'scoped memory for tpu_custom_call.1']
    #allocation5 [shape = 'u8[4096]{0}', space=vmem, size = 0x1000, scoped, tag = 'input window, operand 5']
    #allocation6 [shape = 's32[2]{0}', space=sflag, size = 0x8, scoped, tag = 'scoped memory for tpu_custom_call.1']
    #allocation7 [shape = 'u8[8192]{0}', space=vmem, size = 0x2000, scoped, tag = 'input window, operand 6']
    #allocation8 [shape = 'u8[8192]{0}', space=vmem, size = 0x2000, scoped, tag = 'output window, operand 0']
    #allocation9 [shape = 'u8[4096]{0}', space=vmem, size = 0x1000, scoped, tag = 'output window, operand 1']
    #allocation10 [shape = 's32[2]{0}', space=sflag, size = 0x8, scoped, tag = 'scoped memory for tpu_custom_call.1']
    #allocation11 [shape = 'u8[8192]{0}', space=vmem, size = 0x2000, scoped, tag = 'output window, operand 2']
    %15 = vsyncpa [#allocation3], 0
    %s16 = scalar_lea.sflag [#allocation3], 1
    %17 = vsyncpa %s16, 0
    %18 = vsyncpa [#allocation6], 0
    %s19 = scalar_lea.sflag [#allocation6], 1
    %20 = vsyncpa %s19, 0
    %21 = vsyncpa [#allocation4], 0
    %s22 = scalar_lea.sflag [#allocation4], 1
    %23 = vsyncpa %s22, 0
    %24 = vsyncpa [#allocation10], 0
    %s25 = scalar_lea.sflag [#allocation10], 1
    %26 = vsyncpa %s25, 0
    loop: start=0, step=1, limit=4
    $region2: #{tpu_custom_call.1} parent=1 // loop_pre_header
      _
    $region3: #{tpu_custom_call.1} parent=1 // loop_header
      %s28 = sphi 0, %s32
      %p29 = scmp.ge.s32.totalorder %s28, 4
      %s36 = sphi 0, %s36
      %s38 = sphi 0, %s36
      %s39 = sphi 0, %s38
      %s53 = sphi 0, %s39
      %s59 = sphi 0, %s61
      %s62 = sphi 0, %s59
      %s63 = sphi 0, %s62
      %s79 = sphi 0, %s63
      %s83 = sphi 0, %s83
      %s85 = sphi 0, %s83
      %s86 = sphi 0, %s85
      %s100 = sphi 0, %s86
      %s104 = sphi 0, %s104
      %s106 = sphi 0, %s104
      %s107 = sphi 0, %s106
      %s121 = sphi 0, %s107
      %s127 = sphi 0, %s129
      %s130 = sphi 0, %s127
      %s131 = sphi 0, %s130
      %s147 = sphi 0, %s131
      %s153 = sphi 0, %s155
      %s156 = sphi 0, %s153
      %s157 = sphi 0, %s156
      %s173 = sphi 0, %s157
      %s179 = sphi 0, %s181
      %s182 = sphi 0, %s179
      %s183 = sphi 0, %s182
      %s199 = sphi 0, %s183
      %s205 = sphi 0, %s207
      %s208 = sphi 0, %s205
      %s209 = sphi 0, %s208
      %s225 = sphi 0, %s209
      %s231 = sphi 0, %s233
      %s234 = sphi 0, %s231
      %s235 = sphi 0, %s234
      %s251 = sphi 0, %s235
      %s257 = sphi 0, %s259
      %s260 = sphi 0, %s257
      %s261 = sphi 0, %s260
      %s277 = sphi 0, %s261
    $region4: #{tpu_custom_call.1} parent=1 // loop_header_branch
      %31 = sbr.rel (%p29) target = $region8
    $region5: #{tpu_custom_call.1} parent=1 // loop_body
      %s33 = ssub.s32 %s28, 1
      %s34 = ssub.s32 %s28, 2
      %s35 = sadd.s32 %s28, 1
      %s37 = sadd.s32 %s36, 1
      %p40 = scmp.eq.s32.totalorder %s28, 1
      %p41 = scmp.ne.s32.totalorder %s36, %s38
      %p42 = scmp.eq.s32.totalorder %s28, 0
      %p43 = por %p41, %p42
      %p44 = scmp.ne.s32.totalorder %s36, %s38
      %p45 = scmp.eq.s32.totalorder %s33, 1
      %p46 = por %p44, %p45
      %p47 = scmp.ne.s32.totalorder %s38, %s39
      %p48 = scmp.eq.s32.totalorder %s33, 0
      %p49 = por %p47, %p48
      %p50 = scmp.ne.s32.totalorder %s38, %s39
      %p51 = scmp.eq.s32.totalorder %s34, 1
      %p52 = por %p50, %p51
      %p54 = scmp.ne.s32.totalorder %s39, %s53
      %p55 = scmp.eq.s32.totalorder %s34, 0
      %p56 = por %p54, %p55
      %s57 = ssub.s32 %s28, %s35
      %p58 = scmp.eq.s32.totalorder %s57, 0
      %s60 = sadd.s32 %s59, 1
      %s61 = scalar_select %p58, %s59, %s60
      %p64 = pneg %p58
      %p65 = scmp.eq.s32.totalorder %s28, 1
      %p66 = por %p64, %p65
      %p67 = scmp.ne.s32.totalorder %s59, %s62
      %p68 = scmp.eq.s32.totalorder %s28, 0
      %p69 = por %p67, %p68
      %p70 = scmp.ne.s32.totalorder %s59, %s62
      %p71 = scmp.eq.s32.totalorder %s33, 1
      %p72 = por %p70, %p71
      %p73 = scmp.ne.s32.totalorder %s62, %s63
      %p74 = scmp.eq.s32.totalorder %s33, 0
      %p75 = por %p73, %p74
      %p76 = scmp.ne.s32.totalorder %s62, %s63
      %p77 = scmp.eq.s32.totalorder %s34, 1
      %p78 = por %p76, %p77
      %p80 = scmp.ne.s32.totalorder %s63, %s79
      %p81 = scmp.eq.s32.totalorder %s34, 0
      %p82 = por %p80, %p81
      %s84 = sadd.s32 %s83, 1
      %p87 = scmp.eq.s32.totalorder %s28, 1
      %p88 = scmp.ne.s32.totalorder %s83, %s85
      %p89 = scmp.eq.s32.totalorder %s28, 0
      %p90 = por %p88, %p89
      %p91 = scmp.ne.s32.totalorder %s83, %s85
      %p92 = scmp.eq.s32.totalorder %s33, 1
      %p93 = por %p91, %p92
      %p94 = scmp.ne.s32.totalorder %s85, %s86
      %p95 = scmp.eq.s32.totalorder %s33, 0
      %p96 = por %p94, %p95
      %p97 = scmp.ne.s32.totalorder %s85, %s86
      %p98 = scmp.eq.s32.totalorder %s34, 1
      %p99 = por %p97, %p98
      %p101 = scmp.ne.s32.totalorder %s86, %s100
      %p102 = scmp.eq.s32.totalorder %s34, 0
      %p103 = por %p101, %p102
      %s105 = sadd.s32 %s104, 1
      %p108 = scmp.eq.s32.totalorder %s28, 1
      %p109 = scmp.ne.s32.totalorder %s104, %s106
      %p110 = scmp.eq.s32.totalorder %s28, 0
      %p111 = por %p109, %p110
      %p112 = scmp.ne.s32.totalorder %s104, %s106
      %p113 = scmp.eq.s32.totalorder %s33, 1
      %p114 = por %p112, %p113
      %p115 = scmp.ne.s32.totalorder %s106, %s107
      %p116 = scmp.eq.s32.totalorder %s33, 0
      %p117 = por %p115, %p116
      %p118 = scmp.ne.s32.totalorder %s106, %s107
      %p119 = scmp.eq.s32.totalorder %s34, 1
      %p120 = por %p118, %p119
      %p122 = scmp.ne.s32.totalorder %s107, %s121
      %p123 = scmp.eq.s32.totalorder %s34, 0
      %p124 = por %p122, %p123
      %s125 = ssub.s32 %s28, %s35
      %p126 = scmp.eq.s32.totalorder %s125, 0
      %s128 = sadd.s32 %s127, 1
      %s129 = scalar_select %p126, %s127, %s128
      %p132 = pneg %p126
      %p133 = scmp.eq.s32.totalorder %s28, 1
      %p134 = por %p132, %p133
      %p135 = scmp.ne.s32.totalorder %s127, %s130
      %p136 = scmp.eq.s32.totalorder %s28, 0
      %p137 = por %p135, %p136
      %p138 = scmp.ne.s32.totalorder %s127, %s130
      %p139 = scmp.eq.s32.totalorder %s33, 1
      %p140 = por %p138, %p139
      %p141 = scmp.ne.s32.totalorder %s130, %s131
      %p142 = scmp.eq.s32.totalorder %s33, 0
      %p143 = por %p141, %p142
      %p144 = scmp.ne.s32.totalorder %s130, %s131
      %p145 = scmp.eq.s32.totalorder %s34, 1
      %p146 = por %p144, %p145
      %p148 = scmp.ne.s32.totalorder %s131, %s147
      %p149 = scmp.eq.s32.totalorder %s34, 0
      %p150 = por %p148, %p149
      %s151 = ssub.s32 %s28, %s35
      %p152 = scmp.eq.s32.totalorder %s151, 0
      %s154 = sadd.s32 %s153, 1
      %s155 = scalar_select %p152, %s153, %s154
      %p158 = pneg %p152
      %p159 = scmp.eq.s32.totalorder %s28, 1
      %p160 = por %p158, %p159
      %p161 = scmp.ne.s32.totalorder %s153, %s156
      %p162 = scmp.eq.s32.totalorder %s28, 0
      %p163 = por %p161, %p162
      %p164 = scmp.ne.s32.totalorder %s153, %s156
      %p165 = scmp.eq.s32.totalorder %s33, 1
      %p166 = por %p164, %p165
      %p167 = scmp.ne.s32.totalorder %s156, %s157
      %p168 = scmp.eq.s32.totalorder %s33, 0
      %p169 = por %p167, %p168
      %p170 = scmp.ne.s32.totalorder %s156, %s157
      %p171 = scmp.eq.s32.totalorder %s34, 1
      %p172 = por %p170, %p171
      %p174 = scmp.ne.s32.totalorder %s157, %s173
      %p175 = scmp.eq.s32.totalorder %s34, 0
      %p176 = por %p174, %p175
      %s177 = ssub.s32 %s28, %s35
      %p178 = scmp.eq.s32.totalorder %s177, 0
      %s180 = sadd.s32 %s179, 1
      %s181 = scalar_select %p178, %s179, %s180
      %p184 = pneg %p178
      %p185 = scmp.eq.s32.totalorder %s28, 1
      %p186 = por %p184, %p185
      %p187 = scmp.ne.s32.totalorder %s179, %s182
      %p188 = scmp.eq.s32.totalorder %s28, 0
      %p189 = por %p187, %p188
      %p190 = scmp.ne.s32.totalorder %s179, %s182
      %p191 = scmp.eq.s32.totalorder %s33, 1
      %p192 = por %p190, %p191
      %p193 = scmp.ne.s32.totalorder %s182, %s183
      %p194 = scmp.eq.s32.totalorder %s33, 0
      %p195 = por %p193, %p194
      %p196 = scmp.ne.s32.totalorder %s182, %s183
      %p197 = scmp.eq.s32.totalorder %s34, 1
      %p198 = por %p196, %p197
      %p200 = scmp.ne.s32.totalorder %s183, %s199
      %p201 = scmp.eq.s32.totalorder %s34, 0
      %p202 = por %p200, %p201
      %s203 = ssub.s32 %s28, %s35
      %p204 = scmp.eq.s32.totalorder %s203, 0
      %s206 = sadd.s32 %s205, 1
      %s207 = scalar_select %p204, %s205, %s206
      %p210 = pneg %p204
      %p211 = scmp.eq.s32.totalorder %s28, 1
      %p212 = por %p210, %p211
      %p213 = scmp.ne.s32.totalorder %s205, %s208
      %p214 = scmp.eq.s32.totalorder %s28, 0
      %p215 = por %p213, %p214
      %p216 = scmp.ne.s32.totalorder %s205, %s208
      %p217 = scmp.eq.s32.totalorder %s33, 1
      %p218 = por %p216, %p217
      %p219 = scmp.ne.s32.totalorder %s208, %s209
      %p220 = scmp.eq.s32.totalorder %s33, 0
      %p221 = por %p219, %p220
      %p222 = scmp.ne.s32.totalorder %s208, %s209
      %p223 = scmp.eq.s32.totalorder %s34, 1
      %p224 = por %p222, %p223
      %p226 = scmp.ne.s32.totalorder %s209, %s225
      %p227 = scmp.eq.s32.totalorder %s34, 0
      %p228 = por %p226, %p227
      %s229 = ssub.s32 %s28, %s35
      %p230 = scmp.eq.s32.totalorder %s229, 0
      %s232 = sadd.s32 %s231, 1
      %s233 = scalar_select %p230, %s231, %s232
      %p236 = pneg %p230
      %p237 = scmp.eq.s32.totalorder %s28, 1
      %p238 = por %p236, %p237
      %p239 = scmp.ne.s32.totalorder %s231, %s234
      %p240 = scmp.eq.s32.totalorder %s28, 0
      %p241 = por %p239, %p240
      %p242 = scmp.ne.s32.totalorder %s231, %s234
      %p243 = scmp.eq.s32.totalorder %s33, 1
      %p244 = por %p242, %p243
      %p245 = scmp.ne.s32.totalorder %s234, %s235
      %p246 = scmp.eq.s32.totalorder %s33, 0
      %p247 = por %p245, %p246
      %p248 = scmp.ne.s32.totalorder %s234, %s235
      %p249 = scmp.eq.s32.totalorder %s34, 1
      %p250 = por %p248, %p249
      %p252 = scmp.ne.s32.totalorder %s235, %s251
      %p253 = scmp.eq.s32.totalorder %s34, 0
      %p254 = por %p252, %p253
      %s255 = ssub.s32 %s28, %s35
      %p256 = scmp.eq.s32.totalorder %s255, 0
      %s258 = sadd.s32 %s257, 1
      %s259 = scalar_select %p256, %s257, %s258
      %p262 = pneg %p256
      %p263 = scmp.eq.s32.totalorder %s28, 1
      %p264 = por %p262, %p263
      %p265 = scmp.ne.s32.totalorder %s257, %s260
      %p266 = scmp.eq.s32.totalorder %s28, 0
      %p267 = por %p265, %p266
      %p268 = scmp.ne.s32.totalorder %s257, %s260
      %p269 = scmp.eq.s32.totalorder %s33, 1
      %p270 = por %p268, %p269
      %p271 = scmp.ne.s32.totalorder %s260, %s261
      %p272 = scmp.eq.s32.totalorder %s33, 0
      %p273 = por %p271, %p272
      %p274 = scmp.ne.s32.totalorder %s260, %s261
      %p275 = scmp.eq.s32.totalorder %s34, 1
      %p276 = por %p274, %p275
      %p278 = scmp.ne.s32.totalorder %s261, %s277
      %p279 = scmp.eq.s32.totalorder %s34, 0
      %p280 = por %p278, %p279
      %p281 = scmp.le.s32.totalorder 1, %s28
      %p282 = scmp.lt.s32.totalorder %s28, 3
      %p283 = pnand %p281, %p282
      %p284 = pneg %p283
      // Predicated region
      $region9: #{tpu_custom_call.1} parent=5 // pred_check
        _
      $region10: #{tpu_custom_call.1} parent=5 // pred_check_branch
        %286 = sbr.rel (%p283) target = $region12
      $region11: #{tpu_custom_call.1} parent=5 // pred_region
        %s287 = ssub.s32 %s28, 1
        // Predicated region
        $region13: #{tpu_custom_call.1} parent=11 // pred_check
          %p288 = pneg %p49
        $region14: #{tpu_custom_call.1} parent=11 // pred_check_branch
          %290 = sbr.rel (%p288) target = $region16
        $region15: #{tpu_custom_call.1} parent=11 // pred_region
          _
        $region16: #{tpu_custom_call.1} parent=11 // pred_fallthru
          _
        // Predicated region
        $region17: #{tpu_custom_call.1} parent=11 // pred_check
          %p291 = pneg %p96
        $region18: #{tpu_custom_call.1} parent=11 // pred_check_branch
          %293 = sbr.rel (%p291) target = $region20
        $region19: #{tpu_custom_call.1} parent=11 // pred_region
          _
        $region20: #{tpu_custom_call.1} parent=11 // pred_fallthru
          _
        // Predicated region
        $region21: #{tpu_custom_call.1} parent=11 // pred_check
          %p294 = pneg %p117
        $region22: #{tpu_custom_call.1} parent=11 // pred_check_branch
          %296 = sbr.rel (%p294) target = $region24
        $region23: #{tpu_custom_call.1} parent=11 // pred_region
          _
        $region24: #{tpu_custom_call.1} parent=11 // pred_fallthru
          _
      $region12: #{tpu_custom_call.1} parent=5 // pred_fallthru
        _
      %p297 = scmp.lt.s32.totalorder %s28, 2
      // Predicated region
      $region25: #{tpu_custom_call.1} parent=5 // pred_check
        %p298 = pneg %p297
      $region26: #{tpu_custom_call.1} parent=5 // pred_check_branch
        %300 = sbr.rel (%p298) target = $region28
      $region27: #{tpu_custom_call.1} parent=5 // pred_region
        // Predicated region
        $region29: #{tpu_custom_call.1} parent=27 // pred_check
          %p301 = pneg %p69
        $region30: #{tpu_custom_call.1} parent=27 // pred_check_branch
          %303 = sbr.rel (%p301) target = $region32
        $region31: #{tpu_custom_call.1} parent=27 // pred_region
          %s304 = smul.u32 2, %s28
          %p305 = scmp.lt.s32.totalorder %s304, 3
          %s306 = scalar_select %p305, %s304, 3
          %s307 = smul.addr %s306, 8
          %s308 = scalar_lea.vmem %s1, %s307
          %s309 = smul.u32 2, %s28
        $region32: #{tpu_custom_call.1} parent=27 // pred_fallthru
          _
        // Predicated region
        $region33: #{tpu_custom_call.1} parent=27 // pred_check
          %p310 = pneg %p137
        $region34: #{tpu_custom_call.1} parent=27 // pred_check_branch
          %312 = sbr.rel (%p310) target = $region36
        $region35: #{tpu_custom_call.1} parent=27 // pred_region
          %s313 = sand.u32 %s127, 1
          %s314 = scalar_lea.sflag [#allocation3], %s313
          %s315 = sand.u32 %s127, 1
          %s316 = smul.addr %s315, 8
          %s317 = scalar_lea.vmem [#allocation2], %s316
          %s319 = ssub.s32 128, 128
          %320 = vsyncadd %s314, %s319
          %s321 = smul.addr %s28, 128
          %s322 = scalar_lea.hbm %s4, %s321
          %s324 = sshll.u32 %s317, 4
          %s325 = int_to_ptr.vmem [resolvable:$true] %s324
          %327 = dma.hbm_to_vmem [thread:$0]  %s322, 128, %s325, %s314
        $region36: #{tpu_custom_call.1} parent=27 // pred_fallthru
          _
        // Predicated region
        $region37: #{tpu_custom_call.1} parent=27 // pred_check
          %p328 = pneg %p163
        $region38: #{tpu_custom_call.1} parent=27 // pred_check_branch
          %330 = sbr.rel (%p328) target = $region40
        $region39: #{tpu_custom_call.1} parent=27 // pred_region
          %s331 = sand.u32 %s28, 1
          %s332 = scalar_lea.sflag [#allocation6], %s331
          %s333 = sand.u32 %s153, 1
          %s334 = smul.addr %s333, 4
          %s335 = scalar_lea.vmem [#allocation5], %s334
          %s337 = ssub.s32 64, 64
          %338 = vsyncadd %s332, %s337
          %s339 = smul.addr %s28, 64
          %s340 = scalar_lea.hbm %s5, %s339
          %s342 = sshll.u32 %s335, 4
          %s343 = int_to_ptr.vmem [resolvable:$true] %s342
          %345 = dma.hbm_to_vmem [thread:$0]  %s340, 64, %s343, %s332
        $region40: #{tpu_custom_call.1} parent=27 // pred_fallthru
          _
        // Predicated region
        $region41: #{tpu_custom_call.1} parent=27 // pred_check
          %p346 = pneg %p189
        $region42: #{tpu_custom_call.1} parent=27 // pred_check_branch
          %348 = sbr.rel (%p346) target = $region44
        $region43: #{tpu_custom_call.1} parent=27 // pred_region
          %s349 = sand.u32 %s28, 1
          %s350 = scalar_lea.sflag [#allocation6], %s349
          %s351 = sand.u32 %s179, 1
          %s352 = smul.addr %s351, 8
          %s353 = scalar_lea.vmem [#allocation7], %s352
          %s355 = ssub.s32 128, 128
          %356 = vsyncadd %s350, %s355
          %s357 = smul.addr %s28, 128
          %s358 = scalar_lea.hbm %s6, %s357
          %s360 = sshll.u32 %s353, 4
          %s361 = int_to_ptr.vmem [resolvable:$true] %s360
          %363 = dma.hbm_to_vmem [thread:$0]  %s358, 128, %s361, %s350
        $region44: #{tpu_custom_call.1} parent=27 // pred_fallthru
          _
      $region28: #{tpu_custom_call.1} parent=5 // pred_fallthru
        _
      %p364 = scmp.le.s32.totalorder 1, %s28
      %p365 = scmp.lt.s32.totalorder %s28, 3
      %p366 = pnand %p364, %p365
      %p367 = pneg %p366
      // Predicated region
      $region45: #{tpu_custom_call.1} parent=5 // pred_check
        _
      $region46: #{tpu_custom_call.1} parent=5 // pred_check_branch
        %369 = sbr.rel (%p366) target = $region48
      $region47: #{tpu_custom_call.1} parent=5 // pred_region
        %s370 = ssub.s32 %s28, 1
        %s371 = sand.u32 %s130, 1
        %s372 = scalar_lea.sflag [#allocation3], %s371
        %s373 = sand.u32 %s130, 1
        %s374 = smul.addr %s373, 8
        %s375 = scalar_lea.vmem [#allocation2], %s374
        // Predicated region
        $region49: #{tpu_custom_call.1} parent=47 // pred_check
          %p376 = pneg %p143
        $region50: #{tpu_custom_call.1} parent=47 // pred_check_branch
          %378 = sbr.rel (%p376) target = $region52
        $region51: #{tpu_custom_call.1} parent=47 // pred_region
          %379 = dma.done %s372, 128
        $region52: #{tpu_custom_call.1} parent=47 // pred_fallthru
          _
        %s380 = sand.u32 %s33, 1
        %s381 = scalar_lea.sflag [#allocation6], %s380
        %s382 = sand.u32 %s156, 1
        %s383 = smul.addr %s382, 4
        %s384 = scalar_lea.vmem [#allocation5], %s383
        // Predicated region
        $region53: #{tpu_custom_call.1} parent=47 // pred_check
          %p385 = pneg %p169
        $region54: #{tpu_custom_call.1} parent=47 // pred_check_branch
          %387 = sbr.rel (%p385) target = $region56
        $region55: #{tpu_custom_call.1} parent=47 // pred_region
          %388 = dma.done %s381, 64
        $region56: #{tpu_custom_call.1} parent=47 // pred_fallthru
          _
        %s389 = sand.u32 %s33, 1
        %s390 = scalar_lea.sflag [#allocation6], %s389
        %s391 = sand.u32 %s182, 1
        %s392 = smul.addr %s391, 8
        %s393 = scalar_lea.vmem [#allocation7], %s392
        // Predicated region
        $region57: #{tpu_custom_call.1} parent=47 // pred_check
          %p394 = pneg %p195
        $region58: #{tpu_custom_call.1} parent=47 // pred_check_branch
          %396 = sbr.rel (%p394) target = $region60
        $region59: #{tpu_custom_call.1} parent=47 // pred_region
          %397 = dma.done %s390, 128
        $region60: #{tpu_custom_call.1} parent=47 // pred_fallthru
          _
        %p398 = pneg %p49
        %p399 = pneg %p46
        %s400 = smul.u32 2, %s33
        %p401 = scmp.lt.s32.totalorder %s400, 3
        %s402 = scalar_select %p401, %s400, 3
        %s403 = smul.addr %s402, 8
        %s404 = scalar_lea.vmem %s1, %s403
        %p405 = pneg %p75
        %p406 = pneg %p72
        %p407 = pneg %p96
        %p408 = pneg %p93
        %p409 = pneg %p117
        %p410 = pneg %p114
        %s411 = sand.u32 %s130, 1
        %s412 = scalar_lea.sflag [#allocation3], %s411
        %s413 = sand.u32 %s130, 1
        %s414 = smul.addr %s413, 8
        %s415 = scalar_lea.vmem [#allocation2], %s414
        %p416 = pneg %p143
        %p417 = pneg %p140
        %s418 = sand.u32 %s33, 1
        %s419 = scalar_lea.sflag [#allocation6], %s418
        %s420 = sand.u32 %s156, 1
        %s421 = smul.addr %s420, 4
        %s422 = scalar_lea.vmem [#allocation5], %s421
        %p423 = pneg %p169
        %p424 = pneg %p166
        %s425 = sand.u32 %s33, 1
        %s426 = scalar_lea.sflag [#allocation6], %s425
        %s427 = sand.u32 %s182, 1
        %s428 = smul.addr %s427, 8
        %s429 = scalar_lea.vmem [#allocation7], %s428
        %p430 = pneg %p195
        %p431 = pneg %p192
        %p432 = pneg %p221
        %p433 = pneg %p218
        %s434 = sand.u32 %s208, 1
        %s435 = scalar_lea.sflag [#allocation4], %s434
        %s436 = sand.u32 %s208, 1
        %s437 = smul.addr %s436, 8
        %s438 = scalar_lea.vmem [#allocation8], %s437
        %p439 = pneg %p247
        %p440 = pneg %p244
        %s441 = sand.u32 %s33, 1
        %s442 = scalar_lea.sflag [#allocation10], %s441
        %s443 = sand.u32 %s234, 1
        %s444 = smul.addr %s443, 4
        %s445 = scalar_lea.vmem [#allocation9], %s444
        %p446 = pneg %p273
        %p447 = pneg %p270
        %s448 = sand.u32 %s33, 1
        %s449 = scalar_lea.sflag [#allocation10], %s448
        %s450 = sand.u32 %s260, 1
        %s451 = smul.addr %s450, 8
        %s452 = scalar_lea.vmem [#allocation11], %s451
        %s453 = smul.u32 2, %s33
        %p454 = scmp.lt.s32.totalorder %s453, 3
        %s455 = scalar_select %p454, %s453, 3
        %s456 = smul.addr %s455, 8
        %s457 = scalar_lea.vmem %s1, %s456
        %s458 = smul.u32 2, %s33
        %v459 = vld [vmem:[%s0] sm:$0xff]
        %v460 = vld [vmem:[%s457] sm:$0xff]
        %s461 = scalar_lea.vmem %s0, 8
        %v462 = vld [vmem:[%s461] sm:$0xff]
        %v463 = vld [vmem:[%s457] sm:$0xff]
        %v464 = vld [vmem:[%s457 + $0x8] sm:$0xff]
        %467 = vrot.lane.b32.xlu0 %v463, 127
        %v468 = vpop.permute.xlu0 %467
        %469 = vrot.lane.b32.xlu0 %v464, 127
        %v470 = vpop.permute.xlu0 %469
        %vm471 = vcmask 1039360
        %v472 = vsel %vm471, %v468, %v470
        %vm474 = vcmask 64512
        %v476 = vsel %vm474, %v462, 0
        %478 = vmatprep.subr.mxu0 0.0
        %479 = vmatpush1.msra.mxu0 %v472
        %480 = vmatprep.subr.mxu0 0.0
        %481 = vmatpush1.msra.mxu0 0.0
        %482 = vmatprep.subr.mxu0 0.0
        %483 = vmatpush1.msra.mxu0 0.0
        %484 = vmatprep.subr.mxu0 0.0
        %485 = vmatpush1.msra.mxu0 0.0
        %486 = vmatprep.subr.mxu0 0.0
        %487 = vmatpush1.msra.mxu0 0.0
        %488 = vmatprep.subr.mxu0 0.0
        %489 = vmatpush1.msra.mxu0 0.0
        %490 = vmatprep.subr.mxu0 0.0
        %491 = vmatpush1.msra.mxu0 0.0
        %492 = vmatprep.subr.mxu0 0.0
        %493 = vmatpush1.msra.mxu0 0.0
        %494 = vmatprep.subr.mxu0 0.0
        %495 = vmatpush1.msra.mxu0 0.0
        %496 = vmatprep.subr.mxu0 0.0
        %497 = vmatpush1.msra.mxu0 0.0
        %498 = vmatprep.subr.mxu0 0.0
        %499 = vmatpush1.msra.mxu0 0.0
        %500 = vmatprep.subr.mxu0 0.0
        %501 = vmatpush1.msra.mxu0 0.0
        %502 = vmatprep.subr.mxu0 0.0
        %503 = vmatpush1.msra.mxu0 0.0
        %504 = vmatprep.subr.mxu0 0.0
        %505 = vmatpush1.msra.mxu0 0.0
        %506 = vmatprep.subr.mxu0 0.0
        %507 = vmatpush1.msra.mxu0 0.0
        %508 = vmatprep.subr.mxu0 0.0
        %509 = vmatpush1.msra.mxu0 0.0
        %510 = vmatprep.subr.mxu0 0.0
        %511 = vmatpush1.msra.mxu0 0.0
        %512 = vmatprep.subr.mxu0 0.0
        %513 = vmatpush1.msra.mxu0 0.0
        %514 = vmatprep.subr.mxu0 0.0
        %515 = vmatpush1.msra.mxu0 0.0
        %516 = vmatprep.subr.mxu0 0.0
        %517 = vmatpush1.msra.mxu0 0.0
        %518 = vmatprep.subr.mxu0 0.0
        %519 = vmatpush1.msra.mxu0 0.0
        %520 = vmatprep.subr.mxu0 0.0
        %521 = vmatpush1.msra.mxu0 0.0
        %522 = vmatprep.subr.mxu0 0.0
        %523 = vmatpush1.msra.mxu0 0.0
        %524 = vmatprep.subr.mxu0 0.0
        %525 = vmatpush1.msra.mxu0 0.0
        %526 = vmatprep.subr.mxu0 0.0
        %527 = vmatpush1.msra.mxu0 0.0
        %528 = vmatprep.subr.mxu0 0.0
        %529 = vmatpush1.msra.mxu0 0.0
        %530 = vmatprep.subr.mxu0 0.0
        %531 = vmatpush1.msra.mxu0 0.0
        %532 = vmatprep.subr.mxu0 0.0
        %533 = vmatpush1.msra.mxu0 0.0
        %534 = vmatprep.subr.mxu0 0.0
        %535 = vmatpush1.msra.mxu0 0.0
        %536 = vmatprep.subr.mxu0 0.0
        %537 = vmatpush1.msra.mxu0 0.0
        %538 = vmatprep.subr.mxu0 0.0
        %539 = vmatpush1.msra.mxu0 0.0
        %540 = vmatprep.subr.mxu0 0.0
        %541 = vmatpush1.msra.mxu0 0.0
        %542 = vmatprep.mubr.f32.mxu0 0.0
        %543 = vmatmul.mubr.f32.gmra.mrb[0].mxu0 %v476
        %v544 = vpop.f32.mrb[0].mxu0
        %v545 = vadd.f32 0.0, %v544
        %v546 = vpop.f32.mrb[0].mxu0
        %547 = vdwg.mxu0
        %v549 = vsel %vm474, %v459, 0
        %551 = vmatprep.subr.mxu0 0.0
        %552 = vmatpush1.msra.mxu0 %v460
        %553 = vmatprep.subr.mxu0 0.0
        %554 = vmatpush1.msra.mxu0 0.0
        %555 = vmatprep.subr.mxu0 0.0
        %556 = vmatpush1.msra.mxu0 0.0
        %557 = vmatprep.subr.mxu0 0.0
        %558 = vmatpush1.msra.mxu0 0.0
        %559 = vmatprep.subr.mxu0 0.0
        %560 = vmatpush1.msra.mxu0 0.0
        %561 = vmatprep.subr.mxu0 0.0
        %562 = vmatpush1.msra.mxu0 0.0
        %563 = vmatprep.subr.mxu0 0.0
        %564 = vmatpush1.msra.mxu0 0.0
        %565 = vmatprep.subr.mxu0 0.0
        %566 = vmatpush1.msra.mxu0 0.0
        %567 = vmatprep.subr.mxu0 0.0
        %568 = vmatpush1.msra.mxu0 0.0
        %569 = vmatprep.subr.mxu0 0.0
        %570 = vmatpush1.msra.mxu0 0.0
        %571 = vmatprep.subr.mxu0 0.0
        %572 = vmatpush1.msra.mxu0 0.0
        %573 = vmatprep.subr.mxu0 0.0
        %574 = vmatpush1.msra.mxu0 0.0
        %575 = vmatprep.subr.mxu0 0.0
        %576 = vmatpush1.msra.mxu0 0.0
        %577 = vmatprep.subr.mxu0 0.0
        %578 = vmatpush1.msra.mxu0 0.0
        %579 = vmatprep.subr.mxu0 0.0
        %580 = vmatpush1.msra.mxu0 0.0
        %581 = vmatprep.subr.mxu0 0.0
        %582 = vmatpush1.msra.mxu0 0.0
        %583 = vmatprep.subr.mxu0 0.0
        %584 = vmatpush1.msra.mxu0 0.0
        %585 = vmatprep.subr.mxu0 0.0
        %586 = vmatpush1.msra.mxu0 0.0
        %587 = vmatprep.subr.mxu0 0.0
        %588 = vmatpush1.msra.mxu0 0.0
        %589 = vmatprep.subr.mxu0 0.0
        %590 = vmatpush1.msra.mxu0 0.0
        %591 = vmatprep.subr.mxu0 0.0
        %592 = vmatpush1.msra.mxu0 0.0
        %593 = vmatprep.subr.mxu0 0.0
        %594 = vmatpush1.msra.mxu0 0.0
        %595 = vmatprep.subr.mxu0 0.0
        %596 = vmatpush1.msra.mxu0 0.0
        %597 = vmatprep.subr.mxu0 0.0
        %598 = vmatpush1.msra.mxu0 0.0
        %599 = vmatprep.subr.mxu0 0.0
        %600 = vmatpush1.msra.mxu0 0.0
        %601 = vmatprep.subr.mxu0 0.0
        %602 = vmatpush1.msra.mxu0 0.0
        %603 = vmatprep.subr.mxu0 0.0
        %604 = vmatpush1.msra.mxu0 0.0
        %605 = vmatprep.subr.mxu0 0.0
        %606 = vmatpush1.msra.mxu0 0.0
        %607 = vmatprep.subr.mxu0 0.0
        %608 = vmatpush1.msra.mxu0 0.0
        %609 = vmatprep.subr.mxu0 0.0
        %610 = vmatpush1.msra.mxu0 0.0
        %611 = vmatprep.subr.mxu0 0.0
        %612 = vmatpush1.msra.mxu0 0.0
        %613 = vmatprep.subr.mxu0 0.0
        %614 = vmatpush1.msra.mxu0 0.0
        %615 = vmatprep.mubr.f32.mxu0 0.0
        %616 = vmatmul.mubr.f32.gmra.mrb[0].mxu0 %v549
        %v617 = vpop.f32.mrb[0].mxu0
        %v618 = vadd.f32 %v545, %v617
        %v619 = vpop.f32.mrb[0].mxu0
        %620 = vdwg.mxu0
        %s621 = scalar_lea.vmem %s0, 16
        %v622 = vld [vmem:[%s621] sm:$0xff]
        %623 = vrot.lane.b32.xlu0 %v463, 126
        %v624 = vpop.permute.xlu0 %623
        %625 = vrot.lane.b32.xlu0 %v464, 126
        %v626 = vpop.permute.xlu0 %625
        %vm627 = vcmask 1031168
        %v628 = vsel %vm627, %v624, %v626
        %v631 = vsel %vm474, %v622, 0
        %633 = vmatprep.subr.mxu0 0.0
        %634 = vmatpush1.msra.mxu0 %v628
        %635 = vmatprep.subr.mxu0 0.0
        %636 = vmatpush1.msra.mxu0 0.0
        %637 = vmatprep.subr.mxu0 0.0
        %638 = vmatpush1.msra.mxu0 0.0
        %639 = vmatprep.subr.mxu0 0.0
        %640 = vmatpush1.msra.mxu0 0.0
        %641 = vmatprep.subr.mxu0 0.0
        %642 = vmatpush1.msra.mxu0 0.0
        %643 = vmatprep.subr.mxu0 0.0
        %644 = vmatpush1.msra.mxu0 0.0
        %645 = vmatprep.subr.mxu0 0.0
        %646 = vmatpush1.msra.mxu0 0.0
        %647 = vmatprep.subr.mxu0 0.0
        %648 = vmatpush1.msra.mxu0 0.0
        %649 = vmatprep.subr.mxu0 0.0
        %650 = vmatpush1.msra.mxu0 0.0
        %651 = vmatprep.subr.mxu0 0.0
        %652 = vmatpush1.msra.mxu0 0.0
        %653 = vmatprep.subr.mxu0 0.0
        %654 = vmatpush1.msra.mxu0 0.0
        %655 = vmatprep.subr.mxu0 0.0
        %656 = vmatpush1.msra.mxu0 0.0
        %657 = vmatprep.subr.mxu0 0.0
        %658 = vmatpush1.msra.mxu0 0.0
        %659 = vmatprep.subr.mxu0 0.0
        %660 = vmatpush1.msra.mxu0 0.0
        %661 = vmatprep.subr.mxu0 0.0
        %662 = vmatpush1.msra.mxu0 0.0
        %663 = vmatprep.subr.mxu0 0.0
        %664 = vmatpush1.msra.mxu0 0.0
        %665 = vmatprep.subr.mxu0 0.0
        %666 = vmatpush1.msra.mxu0 0.0
        %667 = vmatprep.subr.mxu0 0.0
        %668 = vmatpush1.msra.mxu0 0.0
        %669 = vmatprep.subr.mxu0 0.0
        %670 = vmatpush1.msra.mxu0 0.0
        %671 = vmatprep.subr.mxu0 0.0
        %672 = vmatpush1.msra.mxu0 0.0
        %673 = vmatprep.subr.mxu0 0.0
        %674 = vmatpush1.msra.mxu0 0.0
        %675 = vmatprep.subr.mxu0 0.0
        %676 = vmatpush1.msra.mxu0 0.0
        %677 = vmatprep.subr.mxu0 0.0
        %678 = vmatpush1.msra.mxu0 0.0
        %679 = vmatprep.subr.mxu0 0.0
        %680 = vmatpush1.msra.mxu0 0.0
        %681 = vmatprep.subr.mxu0 0.0
        %682 = vmatpush1.msra.mxu0 0.0
        %683 = vmatprep.subr.mxu0 0.0
        %684 = vmatpush1.msra.mxu0 0.0
        %685 = vmatprep.subr.mxu0 0.0
        %686 = vmatpush1.msra.mxu0 0.0
        %687 = vmatprep.subr.mxu0 0.0
        %688 = vmatpush1.msra.mxu0 0.0
        %689 = vmatprep.subr.mxu0 0.0
        %690 = vmatpush1.msra.mxu0 0.0
        %691 = vmatprep.subr.mxu0 0.0
        %692 = vmatpush1.msra.mxu0 0.0
        %693 = vmatprep.subr.mxu0 0.0
        %694 = vmatpush1.msra.mxu0 0.0
        %695 = vmatprep.subr.mxu0 0.0
        %696 = vmatpush1.msra.mxu0 0.0
        %697 = vmatprep.mubr.f32.mxu0 0.0
        %698 = vmatmul.mubr.f32.gmra.mrb[0].mxu0 %v631
        %v699 = vpop.f32.mrb[0].mxu0
        %v700 = vadd.f32 0.0, %v699
        %v701 = vpop.f32.mrb[0].mxu0
        %702 = vdwg.mxu0
        %v703 = vadd.f32 %v618, %v700
        %s704 = scalar_lea.vmem %s0, 24
        %v705 = vld [vmem:[%s704] sm:$0xff]
        %706 = vrot.lane.b32.xlu0 %v463, 125
        %v707 = vpop.permute.xlu0 %706
        %708 = vrot.lane.b32.xlu0 %v464, 125
        %v709 = vpop.permute.xlu0 %708
        %vm710 = vcmask 1022976
        %v711 = vsel %vm710, %v707, %v709
        %v714 = vsel %vm474, %v705, 0
        %716 = vmatprep.subr.mxu0 0.0
        %717 = vmatpush1.msra.mxu0 %v711
        %718 = vmatprep.subr.mxu0 0.0
        %719 = vmatpush1.msra.mxu0 0.0
        %720 = vmatprep.subr.mxu0 0.0
        %721 = vmatpush1.msra.mxu0 0.0
        %722 = vmatprep.subr.mxu0 0.0
        %723 = vmatpush1.msra.mxu0 0.0
        %724 = vmatprep.subr.mxu0 0.0
        %725 = vmatpush1.msra.mxu0 0.0
        %726 = vmatprep.subr.mxu0 0.0
        %727 = vmatpush1.msra.mxu0 0.0
        %728 = vmatprep.subr.mxu0 0.0
        %729 = vmatpush1.msra.mxu0 0.0
        %730 = vmatprep.subr.mxu0 0.0
        %731 = vmatpush1.msra.mxu0 0.0
        %732 = vmatprep.subr.mxu0 0.0
        %733 = vmatpush1.msra.mxu0 0.0
        %734 = vmatprep.subr.mxu0 0.0
        %735 = vmatpush1.msra.mxu0 0.0
        %736 = vmatprep.subr.mxu0 0.0
        %737 = vmatpush1.msra.mxu0 0.0
        %738 = vmatprep.subr.mxu0 0.0
        %739 = vmatpush1.msra.mxu0 0.0
        %740 = vmatprep.subr.mxu0 0.0
        %741 = vmatpush1.msra.mxu0 0.0
        %742 = vmatprep.subr.mxu0 0.0
        %743 = vmatpush1.msra.mxu0 0.0
        %744 = vmatprep.subr.mxu0 0.0
        %745 = vmatpush1.msra.mxu0 0.0
        %746 = vmatprep.subr.mxu0 0.0
        %747 = vmatpush1.msra.mxu0 0.0
        %748 = vmatprep.subr.mxu0 0.0
        %749 = vmatpush1.msra.mxu0 0.0
        %750 = vmatprep.subr.mxu0 0.0
        %751 = vmatpush1.msra.mxu0 0.0
        %752 = vmatprep.subr.mxu0 0.0
        %753 = vmatpush1.msra.mxu0 0.0
        %754 = vmatprep.subr.mxu0 0.0
        %755 = vmatpush1.msra.mxu0 0.0
        %756 = vmatprep.subr.mxu0 0.0
        %757 = vmatpush1.msra.mxu0 0.0
        %758 = vmatprep.subr.mxu0 0.0
        %759 = vmatpush1.msra.mxu0 0.0
        %760 = vmatprep.subr.mxu0 0.0
        %761 = vmatpush1.msra.mxu0 0.0
        %762 = vmatprep.subr.mxu0 0.0
        %763 = vmatpush1.msra.mxu0 0.0
        %764 = vmatprep.subr.mxu0 0.0
        %765 = vmatpush1.msra.mxu0 0.0
        %766 = vmatprep.subr.mxu0 0.0
        %767 = vmatpush1.msra.mxu0 0.0
        %768 = vmatprep.subr.mxu0 0.0
        %769 = vmatpush1.msra.mxu0 0.0
        %770 = vmatprep.subr.mxu0 0.0
        %771 = vmatpush1.msra.mxu0 0.0
        %772 = vmatprep.subr.mxu0 0.0
        %773 = vmatpush1.msra.mxu0 0.0
        %774 = vmatprep.subr.mxu0 0.0
        %775 = vmatpush1.msra.mxu0 0.0
        %776 = vmatprep.subr.mxu0 0.0
        %777 = vmatpush1.msra.mxu0 0.0
        %778 = vmatprep.subr.mxu0 0.0
        %779 = vmatpush1.msra.mxu0 0.0
        %780 = vmatprep.mubr.f32.mxu0 0.0
        %781 = vmatmul.mubr.f32.gmra.mrb[0].mxu0 %v714
        %v782 = vpop.f32.mrb[0].mxu0
        %v783 = vadd.f32 0.0, %v782
        %v784 = vpop.f32.mrb[0].mxu0
        %785 = vdwg.mxu0
        %v786 = vadd.f32 %v703, %v783
        %s787 = scalar_lea.vmem %s0, 32
        %v788 = vld [vmem:[%s787] sm:$0xff]
        %789 = vrot.lane.b32.xlu0 %v463, 124
        %v790 = vpop.permute.xlu0 %789
        %791 = vrot.lane.b32.xlu0 %v464, 124
        %v792 = vpop.permute.xlu0 %791
        %vm793 = vcmask 1014784
        %v794 = vsel %vm793, %v790, %v792
        %v797 = vsel %vm474, %v788, 0
        %799 = vmatprep.subr.mxu0 0.0
        %800 = vmatpush1.msra.mxu0 %v794
        %801 = vmatprep.subr.mxu0 0.0
        %802 = vmatpush1.msra.mxu0 0.0
        %803 = vmatprep.subr.mxu0 0.0
        %804 = vmatpush1.msra.mxu0 0.0
        %805 = vmatprep.subr.mxu0 0.0
        %806 = vmatpush1.msra.mxu0 0.0
        %807 = vmatprep.subr.mxu0 0.0
        %808 = vmatpush1.msra.mxu0 0.0
        %809 = vmatprep.subr.mxu0 0.0
        %810 = vmatpush1.msra.mxu0 0.0
        %811 = vmatprep.subr.mxu0 0.0
        %812 = vmatpush1.msra.mxu0 0.0
        %813 = vmatprep.subr.mxu0 0.0
        %814 = vmatpush1.msra.mxu0 0.0
        %815 = vmatprep.subr.mxu0 0.0
        %816 = vmatpush1.msra.mxu0 0.0
        %817 = vmatprep.subr.mxu0 0.0
        %818 = vmatpush1.msra.mxu0 0.0
        %819 = vmatprep.subr.mxu0 0.0
        %820 = vmatpush1.msra.mxu0 0.0
        %821 = vmatprep.subr.mxu0 0.0
        %822 = vmatpush1.msra.mxu0 0.0
        %823 = vmatprep.subr.mxu0 0.0
        %824 = vmatpush1.msra.mxu0 0.0
        %825 = vmatprep.subr.mxu0 0.0
        %826 = vmatpush1.msra.mxu0 0.0
        %827 = vmatprep.subr.mxu0 0.0
        %828 = vmatpush1.msra.mxu0 0.0
        %829 = vmatprep.subr.mxu0 0.0
        %830 = vmatpush1.msra.mxu0 0.0
        %831 = vmatprep.subr.mxu0 0.0
        %832 = vmatpush1.msra.mxu0 0.0
        %833 = vmatprep.subr.mxu0 0.0
        %834 = vmatpush1.msra.mxu0 0.0
        %835 = vmatprep.subr.mxu0 0.0
        %836 = vmatpush1.msra.mxu0 0.0
        %837 = vmatprep.subr.mxu0 0.0
        %838 = vmatpush1.msra.mxu0 0.0
        %839 = vmatprep.subr.mxu0 0.0
        %840 = vmatpush1.msra.mxu0 0.0
        %841 = vmatprep.subr.mxu0 0.0
        %842 = vmatpush1.msra.mxu0 0.0
        %843 = vmatprep.subr.mxu0 0.0
        %844 = vmatpush1.msra.mxu0 0.0
        %845 = vmatprep.subr.mxu0 0.0
        %846 = vmatpush1.msra.mxu0 0.0
        %847 = vmatprep.subr.mxu0 0.0
        %848 = vmatpush1.msra.mxu0 0.0
        %849 = vmatprep.subr.mxu0 0.0
        %850 = vmatpush1.msra.mxu0 0.0
        %851 = vmatprep.subr.mxu0 0.0
        %852 = vmatpush1.msra.mxu0 0.0
        %853 = vmatprep.subr.mxu0 0.0
        %854 = vmatpush1.msra.mxu0 0.0
        %855 = vmatprep.subr.mxu0 0.0
        %856 = vmatpush1.msra.mxu0 0.0
        %857 = vmatprep.subr.mxu0 0.0
        %858 = vmatpush1.msra.mxu0 0.0
        %859 = vmatprep.subr.mxu0 0.0
        %860 = vmatpush1.msra.mxu0 0.0
        %861 = vmatprep.subr.mxu0 0.0
        %862 = vmatpush1.msra.mxu0 0.0
        %863 = vmatprep.mubr.f32.mxu0 0.0
        %864 = vmatmul.mubr.f32.gmra.mrb[0].mxu0 %v797
        %v865 = vpop.f32.mrb[0].mxu0
        %v866 = vadd.f32 0.0, %v865
        %v867 = vpop.f32.mrb[0].mxu0
        %868 = vdwg.mxu0
        %v869 = vadd.f32 %v786, %v866
        %v870 = vld [vmem:[%s2] sm:$0xff]
        %v871 = vld [vmem:[%s3] sm:$0xff]
        %v872 = vld [vmem:[%s375] sm:$0xff]
        %v873 = vld [vmem:[%s384] sm:$0xf]
        %v874 = vunpack.c.l.bf16 %v873
        %v875 = vld [vmem:[%s393] sm:$0xff]
        %v876 = vmul.f32 %v871, %v875
        %v877 = vsub.f32 1.0, %v871
        %v878 = vmul.f32 %v877, %v874
        %v879 = vadd.f32 %v876, %v878
        %v880 = vmul.f32 %v879, 1.8
        %v881 = vadd.f32 %v880, 1.6
        %v882 = vmul.f32 %v872, %v870
        %v883 = vsub.f32 1.0, %v870
        %v884 = vmul.f32 %v883, %v869
        %v885 = vadd.f32 %v882, %v884
        %v886 = vmul.f32 %v881, %v874
        %v887 = vsub.f32 %v885, %v886
        %v888 = vsub.f32 %v887, %v881
        %vm889 = vcmp.gt.f32.partialorder %v888, 0.0
        %890 = vst [vmem:[%s438] sm:$0xff] %v887
        %891 = vst [vmem:[%s452] sm:$0xff] %v879
        %v892 = vsel %vm889, 1, 0
        %v893 = vcvt.s32.f32 %v892
        %v894 = vpack.c.bf16 %v893, %v893
        %895 = vst [vmem:[%s445] sm:$0xf] %v894
        %s896 = sand.u32 %s208, 1
        %s897 = scalar_lea.sflag [#allocation4], %s896
        %s898 = sand.u32 %s208, 1
        %s899 = smul.addr %s898, 8
        %s900 = scalar_lea.vmem [#allocation8], %s899
        %s901 = sand.u32 %s33, 1
        %s902 = scalar_lea.sflag [#allocation10], %s901
        %s903 = sand.u32 %s234, 1
        %s904 = smul.addr %s903, 4
        %s905 = scalar_lea.vmem [#allocation9], %s904
        %s906 = sand.u32 %s33, 1
        %s907 = scalar_lea.sflag [#allocation10], %s906
        %s908 = sand.u32 %s260, 1
        %s909 = smul.addr %s908, 8
        %s910 = scalar_lea.vmem [#allocation11], %s909
        // Predicated region
        $region61: #{tpu_custom_call.1} parent=47 // pred_check
          %p911 = pneg %p218
        $region62: #{tpu_custom_call.1} parent=47 // pred_check_branch
          %913 = sbr.rel (%p911) target = $region64
        $region63: #{tpu_custom_call.1} parent=47 // pred_region
          %s915 = ssub.s32 128, 128
          %916 = vsyncadd %s897, %s915
          %s917 = smul.addr %s33, 128
          %s918 = scalar_lea.hbm %s7, %s917
          %s920 = sshll.u32 %s900, 4
          %s921 = int_to_ptr.vmem [resolvable:$true] %s920
          %923 = dma.vmem_to_hbm [thread:$0]  %s921, 128, %s918, %s897
        $region64: #{tpu_custom_call.1} parent=47 // pred_fallthru
          _
        // Predicated region
        $region65: #{tpu_custom_call.1} parent=47 // pred_check
          %p924 = pneg %p244
        $region66: #{tpu_custom_call.1} parent=47 // pred_check_branch
          %926 = sbr.rel (%p924) target = $region68
        $region67: #{tpu_custom_call.1} parent=47 // pred_region
          %s928 = ssub.s32 64, 64
          %929 = vsyncadd %s902, %s928
          %s930 = smul.addr %s33, 64
          %s931 = scalar_lea.hbm %s8, %s930
          %s933 = sshll.u32 %s905, 4
          %s934 = int_to_ptr.vmem [resolvable:$true] %s933
          %936 = dma.vmem_to_hbm [thread:$0]  %s934, 64, %s931, %s902
        $region68: #{tpu_custom_call.1} parent=47 // pred_fallthru
          _
        // Predicated region
        $region69: #{tpu_custom_call.1} parent=47 // pred_check
          %p937 = pneg %p270
        $region70: #{tpu_custom_call.1} parent=47 // pred_check_branch
          %939 = sbr.rel (%p937) target = $region72
        $region71: #{tpu_custom_call.1} parent=47 // pred_region
          %s941 = ssub.s32 128, 128
          %942 = vsyncadd %s907, %s941
          %s943 = smul.addr %s33, 128
          %s944 = scalar_lea.hbm %s9, %s943
          %s946 = sshll.u32 %s910, 4
          %s947 = int_to_ptr.vmem [resolvable:$true] %s946
          %949 = dma.vmem_to_hbm [thread:$0]  %s947, 128, %s944, %s907
        $region72: #{tpu_custom_call.1} parent=47 // pred_fallthru
          _
      $region48: #{tpu_custom_call.1} parent=5 // pred_fallthru
        _
      %p950 = scmp.le.s32.totalorder 2, %s28
      // Predicated region
      $region73: #{tpu_custom_call.1} parent=5 // pred_check
        %p951 = pneg %p950
      $region74: #{tpu_custom_call.1} parent=5 // pred_check_branch
        %953 = sbr.rel (%p951) target = $region76
      $region75: #{tpu_custom_call.1} parent=5 // pred_region
        %s954 = ssub.s32 %s28, 2
        // Predicated region
        $region77: #{tpu_custom_call.1} parent=75 // pred_check
          %p955 = pneg %p224
        $region78: #{tpu_custom_call.1} parent=75 // pred_check_branch
          %957 = sbr.rel (%p955) target = $region80
        $region79: #{tpu_custom_call.1} parent=75 // pred_region
          %s958 = sand.u32 %s209, 1
          %s959 = scalar_lea.sflag [#allocation4], %s958
          %s960 = sand.u32 %s209, 1
          %s961 = smul.addr %s960, 8
          %s962 = scalar_lea.vmem [#allocation8], %s961
          %963 = dma.done %s959, 128
        $region80: #{tpu_custom_call.1} parent=75 // pred_fallthru
          _
        // Predicated region
        $region81: #{tpu_custom_call.1} parent=75 // pred_check
          %p964 = pneg %p250
        $region82: #{tpu_custom_call.1} parent=75 // pred_check_branch
          %966 = sbr.rel (%p964) target = $region84
        $region83: #{tpu_custom_call.1} parent=75 // pred_region
          %s967 = sand.u32 %s34, 1
          %s968 = scalar_lea.sflag [#allocation10], %s967
          %s969 = sand.u32 %s235, 1
          %s970 = smul.addr %s969, 4
          %s971 = scalar_lea.vmem [#allocation9], %s970
          %972 = dma.done %s968, 64
        $region84: #{tpu_custom_call.1} parent=75 // pred_fallthru
          _
        // Predicated region
        $region85: #{tpu_custom_call.1} parent=75 // pred_check
          %p973 = pneg %p276
        $region86: #{tpu_custom_call.1} parent=75 // pred_check_branch
          %975 = sbr.rel (%p973) target = $region88
        $region87: #{tpu_custom_call.1} parent=75 // pred_region
          %s976 = sand.u32 %s34, 1
          %s977 = scalar_lea.sflag [#allocation10], %s976
          %s978 = sand.u32 %s261, 1
          %s979 = smul.addr %s978, 8
          %s980 = scalar_lea.vmem [#allocation11], %s979
          %981 = dma.done %s977, 128
        $region88: #{tpu_custom_call.1} parent=75 // pred_fallthru
          _
      $region76: #{tpu_custom_call.1} parent=5 // pred_fallthru
        _
    $region6: #{tpu_custom_call.1} parent=1 // loop_footer
      %s32 = sadd.s32 1, %s28
    $region7: #{tpu_custom_call.1} parent=1 // loop_footer_branch
      %27 = sbr.rel target = $region3
    $region8: #{tpu_custom_call.1} parent=1 // loop_exit
      _
    %982 = vsyncpa [#allocation3], 1
    %s983 = scalar_lea.sflag [#allocation3], 1
    %984 = vsyncpa %s983, 1
    %985 = vsyncpa [#allocation6], 1
    %s986 = scalar_lea.sflag [#allocation6], 1
    %987 = vsyncpa %s986, 1
    %988 = vsyncpa [#allocation4], 1
    %s989 = scalar_lea.sflag [#allocation4], 1
    %990 = vsyncpa %s989, 1
    %991 = vsyncpa [#allocation10], 1
    %s992 = scalar_lea.sflag [#allocation10], 1
    %993 = vsyncpa %s992, 1

</llo_original>
